<compile_context>
chip_gen: v7x
topology: tpu7x:2x2x1
jax: 0.10.0
libtpu: 0.0.40
codegen_flags: <defaults>
</compile_context>

<pallas_src>
import functools
import math

import jax
import jax.numpy as jnp
from jax.experimental import pallas as pl
from jax.experimental.pallas import tpu as pltpu


# Budgets chosen so both paths fit the *default* scoped VMEM on v5e/v6e/v7x,
# accounting for double-buffering of every BlockSpec input/output.
# TODO(synk): gate these with pltpu.get_tpu_info() to exploit v6e's headroom
# (tile_t up to 1024 / larger resident tables) without risking v5e/v7x.
_RESIDENT_TABLE_BYTES = 2 * 1024 * 1024   # Path-A threshold for the table
_PATH_A_TILE_BYTES = 1 * 1024 * 1024      # per (tile_t, d_model) output buffer
_PATH_B_TILE_BYTES = 2 * 1024 * 1024
_PATH_A_MAX_TILE_T = 512
_PATH_B_MAX_TILE_T = 256                  # caps concurrent row DMAs at 2*256
_VOCAB_CHUNK = 512                        # one-hot chunk along the vocab axis


def _round_up(x, m):
    return (x + m - 1) // m * m


def _cdiv(a, b):
    return (a + b - 1) // b


# ---------------------------------------------------------------------------
# Path A: small vocab.  Table resident in VMEM, gather = chunked one-hot MXU
# matmuls accumulated into an f32 VMEM scratch.
# ---------------------------------------------------------------------------
def _resident_table_kernel(ids_ref, table_ref, out_ref, acc_ref, *, scale, chunk):
    ids = ids_ref[...]                          # (tile_t, 1) int32
    tile_t = ids.shape[0]
    vocab_pad = table_ref.shape[0]
    n_chunks = vocab_pad // chunk               # static (<= ~16)

    iota = jax.lax.broadcasted_iota(jnp.int32, (tile_t, chunk), 1)
    for c in range(n_chunks):                   # static unroll
        base = c * chunk
        # One-hot built directly in the table's dtype; ids outside
        # [base, base+chunk) (incl. out-of-range ids) give all-zero rows, so
        # no out-of-bounds read is ever possible.
        onehot = (ids - base == iota).astype(table_ref.dtype)
        part = jnp.dot(onehot, table_ref[pl.ds(base, chunk), :],
                       preferred_element_type=jnp.float32)
        if c == 0:
            acc_ref[...] = part
        else:
            acc_ref[...] += part
    out_ref[...] = (acc_ref[...] * scale).astype(out_ref.dtype)


# ---------------------------------------------------------------------------
# Path B: large vocab.  Table in HBM, ids in SMEM, batched double-buffered
# manual row-gather: per grid step issue next tile's row DMAs, wait this
# tile's rows, then scale + store one dense (tile_t, d_model) block.
# ---------------------------------------------------------------------------
def _hbm_gather_kernel(ids_ref, table_ref, out_ref, buf_ref, sem_ref, *,
                       scale, tile_t):
    i = pl.program_id(0)
    n_tiles = pl.num_programs(0)
    slot = i & 1

    def issue(tile_idx, slot_idx):
        id_base = tile_idx * tile_t
        buf_base = slot_idx * tile_t

        def body(r, carry):
            row = ids_ref[id_base + r]                       # SMEM scalar read
            pltpu.make_async_copy(
                table_ref.at[pl.ds(row, 1), :],              # one HBM table row
                buf_ref.at[pl.ds(buf_base + r, 1), :],
                sem_ref.at[slot_idx]).start()
            return carry

        jax.lax.fori_loop(0, tile_t, body, 0)

    # Prime the pipeline: the very first step fetches its own rows.
    @pl.when(i == 0)
    def _():
        issue(0, 0)

    # Prefetch the next tile's rows into the other slot so those DMAs overlap
    # this tile's wait, the scale/store below, and the output write-back.
    @pl.when(i + 1 < n_tiles)
    def _():
        issue(i + 1, 1 - slot)

    # Wait for all tile_t row copies of the current slot (one wait per
    # identically-shaped row copy).
    def wait_body(r, carry):
        pltpu.make_async_copy(table_ref.at[pl.ds(0, 1), :],
                              buf_ref.at[pl.ds(0, 1), :],
                              sem_ref.at[slot]).wait()
        return carry

    jax.lax.fori_loop(0, tile_t, wait_body, 0)

    start = pl.multiple_of(slot * tile_t, 8)
    rows = buf_ref[pl.ds(start, tile_t), :]
    out_ref[...] = (rows.astype(jnp.float32) * scale).astype(out_ref.dtype)


def input_embeddings(token_ids, embedding_table,
                     resident_table_bytes=_RESIDENT_TABLE_BYTES):
    """Forward of InputEmbeddings: embedding_table[token_ids] * sqrt(d_model).

    token_ids:       (B, S) integer token ids.
    embedding_table: (vocab, d_model) float nn.Embedding weight.
    returns:         (B, S, d_model), dtype = embedding_table.dtype.
    """
    batch, seq = token_ids.shape
    vocab, d_model = embedding_table.shape
    out_dtype = embedding_table.dtype
    dsize = jnp.dtype(out_dtype).itemsize
    scale = math.sqrt(d_model)

    n_tok = batch * seq
    flat_ids = token_ids.reshape(n_tok).astype(jnp.int32)

    # Lane-dense output stores: pad d_model to a multiple of 128 and slice the
    # padding off afterwards (no-op for the usual 128-multiple d_model).
    # TODO(synk): for huge tables, do this padding once at parameter-init time.
    d_model_pad = _round_up(d_model, 128)
    table = embedding_table
    if d_model_pad != d_model:
        table = jnp.pad(table, ((0, 0), (0, d_model_pad - d_model)))

    table_bytes = vocab * d_model * dsize
    use_resident_table = table_bytes <= resident_table_bytes

    if use_resident_table:
        # ----- Path A ------------------------------------------------------
        chunk = min(_VOCAB_CHUNK, _round_up(vocab, 8))
        vocab_pad = _round_up(_round_up(vocab, 8), chunk)
        if vocab_pad != vocab:
            table = jnp.pad(table, ((0, vocab_pad - vocab), (0, 0)))

        tile_cap = max(8, (_PATH_A_TILE_BYTES // (d_model_pad * dsize)) // 8 * 8)
        tile_t = min(_PATH_A_MAX_TILE_T, tile_cap)
        # Short sequences: make at least two tiles so both v7x TensorCores get
        # work under the "parallel" grid axis (neutral on v5e/v6e).
        tile_t = min(tile_t, max(8, _round_up(_cdiv(n_tok, 2), 8)))
        n_tok_pad = _round_up(n_tok, tile_t)
        n_tiles = n_tok_pad // tile_t

        # Pad ids with 0 (a valid row); padded rows are sliced off below.
        ids2d = jnp.zeros((n_tok_pad, 1), jnp.int32).at[:n_tok, 0].set(flat_ids)

        cost = pl.CostEstimate(
            flops=2 * n_tok_pad * vocab_pad * d_model_pad + n_tok_pad * d_model_pad,
            transcendentals=0,
            bytes_accessed=(vocab_pad * d_model_pad * dsize + ids2d.size * 4
                            + n_tok_pad * d_model_pad * dsize))

        out_flat = pl.pallas_call(
            functools.partial(_resident_table_kernel, scale=scale, chunk=chunk),
            out_shape=jax.ShapeDtypeStruct((n_tok_pad, d_model_pad), out_dtype),
            grid_spec=pltpu.PrefetchScalarGridSpec(
                num_scalar_prefetch=0,
                grid=(n_tiles,),
                in_specs=[
                    pl.BlockSpec((tile_t, 1), lambda i: (i, 0)),
                    # Constant block index -> the table is DMA'd into VMEM once
                    # and reused across all grid steps (its two pipeline
                    # buffers are what the 2 MiB budget accounts for).
                    pl.BlockSpec((vocab_pad, d_model_pad), lambda i: (0, 0)),
                ],
                out_specs=pl.BlockSpec((tile_t, d_model_pad), lambda i: (i, 0)),
                scratch_shapes=[pltpu.VMEM((tile_t, d_model_pad), jnp.float32)],
            ),
            compiler_params=pltpu.CompilerParams(
                dimension_semantics=("parallel",)),
            cost_estimate=cost,
        )(ids2d, table)
    else:
        # ----- Path B ------------------------------------------------------
        # Clamp so a bad token id can never drive an out-of-bounds row DMA
        # (PyTorch raises; we clamp).
        safe_ids = jnp.clip(flat_ids, 0, vocab - 1)

        tile_cap = max(8, (_PATH_B_TILE_BYTES // (d_model_pad * dsize)) // 8 * 8)
        tile_t = min(_PATH_B_MAX_TILE_T, tile_cap, _round_up(n_tok, 8))
        n_tok_pad = _round_up(n_tok, tile_t)
        n_tiles = n_tok_pad // tile_t

        ids_pad = jnp.zeros((n_tok_pad,), jnp.int32).at[:n_tok].set(safe_ids)
        # TODO(synk): if n_tok grows so large that the id vector no longer fits
        # SMEM (~hundreds of K tokens), split the call into outer chunks.

        cost = pl.CostEstimate(
            flops=n_tok_pad * d_model_pad,
            transcendentals=0,
            bytes_accessed=2 * n_tok_pad * d_model_pad * dsize + n_tok_pad * 4)

        out_flat = pl.pallas_call(
            functools.partial(_hbm_gather_kernel, scale=scale, tile_t=tile_t),
            out_shape=jax.ShapeDtypeStruct((n_tok_pad, d_model_pad), out_dtype),
            grid_spec=pltpu.PrefetchScalarGridSpec(
                num_scalar_prefetch=1,        # ids -> SMEM, read per row in-kernel
                grid=(n_tiles,),
                in_specs=[pl.BlockSpec(memory_space=pl.ANY)],   # table in HBM
                out_specs=pl.BlockSpec((tile_t, d_model_pad),
                                       lambda i, ids: (i, 0)),
                scratch_shapes=[
                    pltpu.VMEM((2 * tile_t, d_model_pad), out_dtype),
                    pltpu.SemaphoreType.DMA((2,)),
                ],
            ),
            # "arbitrary": the cross-step row prefetch carries state between
            # consecutive grid steps, so this axis must run sequentially.
            compiler_params=pltpu.CompilerParams(
                dimension_semantics=("arbitrary",)),
            cost_estimate=cost,
        )(ids_pad, table)

    out_flat = out_flat[:n_tok, :d_model]
    return out_flat.reshape(batch, seq, d_model)


if __name__ == "__main__":
    d_model = 128
    vocab_size = 64
    batch, seq = 2, 8

    key = jax.random.PRNGKey(0)
    k_emb, k_ids = jax.random.split(key)

    # Deterministic parameter init (stands in for nn.Embedding's N(0,1) init).
    embedding_table = jax.random.normal(k_emb, (vocab_size, d_model), jnp.float32)
    token_ids = jax.random.randint(k_ids, (batch, seq), 0, vocab_size, jnp.int32)

    ref = embedding_table[token_ids] * math.sqrt(d_model)

    # Path A (VMEM-resident table, chunked one-hot MXU gather) — default here.
    out_a = jax.block_until_ready(input_embeddings(token_ids, embedding_table))
    assert out_a.shape == (batch, seq, d_model)
    assert jnp.allclose(out_a, ref, atol=1e-5, rtol=1e-5)

    # Path B (HBM table, batched double-buffered DMA row gather) — force it by
    # pretending the table does not fit in VMEM, to exercise the fallback.
    out_b = jax.block_until_ready(
        input_embeddings(token_ids, embedding_table, resident_table_bytes=0))
    assert out_b.shape == (batch, seq, d_model)
    assert jnp.allclose(out_b, ref, atol=1e-5, rtol=1e-5)

    print("KERNEL_OK")
</pallas_src>

<mosaic_0001>
module attributes {stable_mosaic.version = 11 : i64} {
  func.func @_resident_table_kernel(%arg0: i32, %arg1: memref<8x1xi32, #tpu.memory_space<vmem>>, %arg2: memref<64x128xf32, #tpu.memory_space<vmem>>, %arg3: memref<8x128xf32, #tpu.memory_space<vmem>>, %arg4: memref<8x128xf32, #tpu.memory_space<vmem>>) attributes {dimension_semantics = [#tpu.dimension_semantics<parallel>], iteration_bounds = array<i64: 2>, scalar_prefetch = 0 : i64, scratch_operands = 1 : i64, tpu.core_type = #tpu.core_type<tc>, window_params = [{transform_indices = @transform_0, window_bounds = array<i64: 8, 1>}, {pipeline_mode = #tpu.pipeline_mode<synchronous>, transform_indices = @transform_1, window_bounds = array<i64: 64, 128>}, {transform_indices = @transform_2, window_bounds = array<i64: 8, 128>}]} {
    %c0 = arith.constant 0 : index
    %c0_0 = arith.constant 0 : index
    %0 = vector.load %arg1[%c0, %c0_0] : memref<8x1xi32, #tpu.memory_space<vmem>>, vector<8x1xi32>
    %1 = tpu.iota {dimensions = array<i32: 1>} : vector<8x64xi32>
    %c0_i32 = arith.constant 0 : i32
    %2 = vector.broadcast %c0_i32 : i32 to vector<8x1xi32>
    %3 = arith.subi %0, %2 : vector<8x1xi32>
    %4 = vector.broadcast %3 : vector<8x1xi32> to vector<8x64xi32>
    %5 = arith.cmpi eq, %4, %1 : vector<8x64xi32>
    %6 = arith.extui %5 : vector<8x64xi1> to vector<8x64xi32>
    %7 = arith.sitofp %6 : vector<8x64xi32> to vector<8x64xf32>
    %c0_1 = arith.constant 0 : index
    %c0_2 = arith.constant 0 : index
    %8 = vector.load %arg2[%c0_1, %c0_2] : memref<64x128xf32, #tpu.memory_space<vmem>>, vector<64x128xf32>
    %cst = arith.constant dense<0.000000e+00> : vector<8x128xf32>
    %9 = tpu.matmul %7, %8, %cst {dimension_numbers = #tpu.dot_dimension_numbers<[1], [0], [0], [1], [0, 0, 1, 1], [], []>} : vector<8x64xf32>, vector<64x128xf32>, vector<8x128xf32> -> vector<8x128xf32>
    %c0_3 = arith.constant 0 : index
    %c0_4 = arith.constant 0 : index
    %10 = vector.load %arg4[%c0_3, %c0_4] : memref<8x128xf32, #tpu.memory_space<vmem>>, vector<8x128xf32>
    tpu.vector_store %arg4[%c0_3, %c0_4], %9 {strides = array<i32>} : memref<8x128xf32, #tpu.memory_space<vmem>>, vector<8x128xf32>,
    %c0_5 = arith.constant 0 : index
    %c0_6 = arith.constant 0 : index
    %11 = vector.load %arg4[%c0_5, %c0_6] : memref<8x128xf32, #tpu.memory_space<vmem>>, vector<8x128xf32>
    %cst_7 = arith.constant 11.3137083 : f32
    %12 = vector.broadcast %cst_7 : f32 to vector<8x128xf32>
    %13 = arith.mulf %11, %12 : vector<8x128xf32>
    %c0_8 = arith.constant 0 : index
    %c0_9 = arith.constant 0 : index
    %14 = vector.load %arg3[%c0_8, %c0_9] : memref<8x128xf32, #tpu.memory_space<vmem>>, vector<8x128xf32>
    tpu.vector_store %arg3[%c0_8, %c0_9], %13 {strides = array<i32>} : memref<8x128xf32, #tpu.memory_space<vmem>>, vector<8x128xf32>,
    return
  }
  func.func @transform_0(%arg0: i32) -> (i32, i32) {
    %c0_i32 = arith.constant 0 : i32
    %c0_i32_0 = arith.constant 0 : i32
    return %arg0, %c0_i32 : i32, i32
  }
  func.func @transform_1(%arg0: i32) -> (i32, i32) {
    %c0_i32 = arith.constant 0 : i32
    %c0_i32_0 = arith.constant 0 : i32
    %c0_i32_1 = arith.constant 0 : i32
    return %c0_i32, %c0_i32_0 : i32, i32
  }
  func.func @transform_2(%arg0: i32) -> (i32, i32) {
    %c0_i32 = arith.constant 0 : i32
    %c0_i32_0 = arith.constant 0 : i32
    return %arg0, %c0_i32 : i32, i32
  }
}

</mosaic_0001>

<llo_original>
// kernel: tpu_custom_call.1
$region0: #{tpu_custom_call.1}
  #allocation0 [shape = 'u32[]', space=smem, size = 0x4, offset = 0x4, fixed_abs, tag = 'smem constant byte address 0x4 - core index']
  #allocation1 [shape = 'u32[144,128]{1,0:T(1,128)}', space=vmem, size = 0x12000, scoped, tag = 'internal scratch']
  #allocation2 [shape = 'f32[8,128]{1,0:T(8,128)}', space=vmem, size = 0x1000, scoped, tag = 'scratch operand']
  %s0 = inlined_call_operand.vmem [shape: s32[16,1], index: 0, kind: input, shape index: {}]
  %s1 = inlined_call_operand.hbm [shape: f32[64,128], index: 1, kind: input, shape index: {}]
  %s2 = inlined_call_operand.hbm [shape: f32[16,128], index: 2, kind: output, shape index: {}]
  %s3 = sld [smem:[#allocation0]]
  $region45: #{tpu_custom_call.1} parent=0
    _
  %s5 = ssub.s32 1, %s3
  %s6 = scalar_select 0, %s5, %s3
  $region1: #{tpu_custom_call.1} parent=0
    #allocation3 [shape = 'u8[32768]{0}', space=vmem, size = 0x8000, scoped, tag = 'input window, operand 1, single buffered']
    #allocation4 [shape = 's32[2]{0}', space=sflag, size = 0x8, scoped, tag = 'scoped memory for tpu_custom_call.1']
    #allocation5 [shape = 's32[2]{0}', space=sflag, size = 0x8, scoped, tag = 'scoped memory for tpu_custom_call.1']
    #allocation6 [shape = 'u8[8192]{0}', space=vmem, size = 0x2000, scoped, tag = 'output window, operand 0']
    %7 = vsyncpa [#allocation4], 0
    %8 = vsyncpa [#allocation5], 0
    %s9 = scalar_lea.sflag [#allocation5], 1
    %10 = vsyncpa %s9, 0
    loop: start=0, step=1, limit=4
    $region2: #{tpu_custom_call.1} parent=1 // loop_pre_header
      _
    $region3: #{tpu_custom_call.1} parent=1 // loop_header
      %s12 = sphi 0, %s16
      %p13 = scmp.ge.s32.totalorder %s12, 4
      %s22 = sphi 0, %s24
      %s25 = sphi 0, %s22
      %s26 = sphi 0, %s25
      %s42 = sphi 0, %s26
      %s46 = sphi 0, %s46
      %s48 = sphi 0, %s46
      %s49 = sphi 0, %s48
      %s63 = sphi 0, %s49
      %s69 = sphi 0, %s71
      %s72 = sphi 0, %s69
      %s73 = sphi 0, %s72
      %s89 = sphi 0, %s73
    $region4: #{tpu_custom_call.1} parent=1 // loop_header_branch
      %15 = sbr.rel (%p13) target = $region8
    $region5: #{tpu_custom_call.1} parent=1 // loop_body
      %s17 = ssub.s32 %s12, 1
      %s18 = ssub.s32 %s12, 2
      %s19 = sadd.s32 %s12, 1
      %s20 = ssub.s32 %s12, %s19
      %p21 = scmp.eq.s32.totalorder %s20, 0
      %s23 = sadd.s32 %s22, 1
      %s24 = scalar_select %p21, %s22, %s23
      %p27 = pneg %p21
      %p28 = scmp.eq.s32.totalorder %s12, 1
      %p29 = por %p27, %p28
      %p30 = scmp.ne.s32.totalorder %s22, %s25
      %p31 = scmp.eq.s32.totalorder %s12, 0
      %p32 = por %p30, %p31
      %p33 = scmp.ne.s32.totalorder %s22, %s25
      %p34 = scmp.eq.s32.totalorder %s17, 1
      %p35 = por %p33, %p34
      %p36 = scmp.ne.s32.totalorder %s25, %s26
      %p37 = scmp.eq.s32.totalorder %s17, 0
      %p38 = por %p36, %p37
      %p39 = scmp.ne.s32.totalorder %s25, %s26
      %p40 = scmp.eq.s32.totalorder %s18, 1
      %p41 = por %p39, %p40
      %p43 = scmp.ne.s32.totalorder %s26, %s42
      %p44 = scmp.eq.s32.totalorder %s18, 0
      %p45 = por %p43, %p44
      %s47 = sadd.s32 %s46, 1
      %p50 = scmp.eq.s32.totalorder %s12, 1
      %p51 = scmp.ne.s32.totalorder %s46, %s48
      %p52 = scmp.eq.s32.totalorder %s12, 0
      %p53 = por %p51, %p52
      %p54 = scmp.ne.s32.totalorder %s46, %s48
      %p55 = scmp.eq.s32.totalorder %s17, 1
      %p56 = por %p54, %p55
      %p57 = scmp.ne.s32.totalorder %s48, %s49
      %p58 = scmp.eq.s32.totalorder %s17, 0
      %p59 = por %p57, %p58
      %p60 = scmp.ne.s32.totalorder %s48, %s49
      %p61 = scmp.eq.s32.totalorder %s18, 1
      %p62 = por %p60, %p61
      %p64 = scmp.ne.s32.totalorder %s49, %s63
      %p65 = scmp.eq.s32.totalorder %s18, 0
      %p66 = por %p64, %p65
      %s67 = ssub.s32 %s12, %s19
      %p68 = scmp.eq.s32.totalorder %s67, 0
      %s70 = sadd.s32 %s69, 1
      %s71 = scalar_select %p68, %s69, %s70
      %p74 = pneg %p68
      %p75 = scmp.eq.s32.totalorder %s12, 1
      %p76 = por %p74, %p75
      %p77 = scmp.ne.s32.totalorder %s69, %s72
      %p78 = scmp.eq.s32.totalorder %s12, 0
      %p79 = por %p77, %p78
      %p80 = scmp.ne.s32.totalorder %s69, %s72
      %p81 = scmp.eq.s32.totalorder %s17, 1
      %p82 = por %p80, %p81
      %p83 = scmp.ne.s32.totalorder %s72, %s73
      %p84 = scmp.eq.s32.totalorder %s17, 0
      %p85 = por %p83, %p84
      %p86 = scmp.ne.s32.totalorder %s72, %s73
      %p87 = scmp.eq.s32.totalorder %s18, 1
      %p88 = por %p86, %p87
      %p90 = scmp.ne.s32.totalorder %s73, %s89
      %p91 = scmp.eq.s32.totalorder %s18, 0
      %p92 = por %p90, %p91
      %p93 = scmp.le.s32.totalorder 1, %s12
      %p94 = scmp.lt.s32.totalorder %s12, 3
      %p95 = pnand %p93, %p94
      %p96 = pneg %p95
      // Predicated region
      $region9: #{tpu_custom_call.1} parent=5 // pred_check
        _
      $region10: #{tpu_custom_call.1} parent=5 // pred_check_branch
        %98 = sbr.rel (%p95) target = $region12
      $region11: #{tpu_custom_call.1} parent=5 // pred_region
        %s99 = ssub.s32 %s12, 1
        // Predicated region
        $region13: #{tpu_custom_call.1} parent=11 // pred_check
          %p100 = pneg %p59
        $region14: #{tpu_custom_call.1} parent=11 // pred_check_branch
          %102 = sbr.rel (%p100) target = $region16
        $region15: #{tpu_custom_call.1} parent=11 // pred_region
          %s104 = ssub.s32 1024, 1024
          %105 = vsyncadd [#allocation4], %s104
          %s106 = sshll.u32 [#allocation3], 4
          %s107 = int_to_ptr.vmem [resolvable:$true] %s106
          %112 = dma.hbm_to_vmem [thread:$0]  %s1, 1024, %s107, [#allocation4], 128, 128, 8
        $region16: #{tpu_custom_call.1} parent=11 // pred_fallthru
          _
      $region12: #{tpu_custom_call.1} parent=5 // pred_fallthru
        _
      %p113 = scmp.lt.s32.totalorder %s12, 2
      // Predicated region
      $region17: #{tpu_custom_call.1} parent=5 // pred_check
        %p114 = pneg %p113
      $region18: #{tpu_custom_call.1} parent=5 // pred_check_branch
        %116 = sbr.rel (%p114) target = $region20
      $region19: #{tpu_custom_call.1} parent=5 // pred_region
        // Predicated region
        $region21: #{tpu_custom_call.1} parent=19 // pred_check
          %p117 = pneg %p32
        $region22: #{tpu_custom_call.1} parent=19 // pred_check_branch
          %119 = sbr.rel (%p117) target = $region24
        $region23: #{tpu_custom_call.1} parent=19 // pred_region
          %p120 = scmp.lt.s32.totalorder %s12, 1
          %s121 = scalar_select %p120, %s12, 1
          %s122 = smul.addr %s121, 8
          %s123 = scalar_lea.vmem %s0, %s122
        $region24: #{tpu_custom_call.1} parent=19 // pred_fallthru
          _
      $region20: #{tpu_custom_call.1} parent=5 // pred_fallthru
        _
      %p124 = scmp.le.s32.totalorder 1, %s12
      %p125 = scmp.lt.s32.totalorder %s12, 3
      %p126 = pnand %p124, %p125
      %p127 = pneg %p126
      // Predicated region
      $region25: #{tpu_custom_call.1} parent=5 // pred_check
        _
      $region26: #{tpu_custom_call.1} parent=5 // pred_check_branch
        %129 = sbr.rel (%p126) target = $region28
      $region27: #{tpu_custom_call.1} parent=5 // pred_region
        %s130 = ssub.s32 %s12, 1
        // Predicated region
        $region29: #{tpu_custom_call.1} parent=27 // pred_check
          %p131 = pneg %p59
        $region30: #{tpu_custom_call.1} parent=27 // pred_check_branch
          %133 = sbr.rel (%p131) target = $region32
        $region31: #{tpu_custom_call.1} parent=27 // pred_region
          %134 = dma.done [#allocation4], 1024
        $region32: #{tpu_custom_call.1} parent=27 // pred_fallthru
          _
        %p135 = scmp.lt.s32.totalorder %s17, 1
        %s136 = scalar_select %p135, %s17, 1
        %s137 = smul.addr %s136, 8
        %s138 = scalar_lea.vmem %s0, %s137
        %p139 = pneg %p38
        %p140 = pneg %p35
        %p141 = pneg %p59
        %p142 = pneg %p56
        %p143 = pneg %p85
        %p144 = pneg %p82
        %s145 = sand.u32 %s72, 1
        %s146 = scalar_lea.sflag [#allocation5], %s145
        %s147 = sand.u32 %s72, 1
        %s148 = smul.addr %s147, 8
        %s149 = scalar_lea.vmem [#allocation6], %s148
        %p150 = scmp.lt.s32.totalorder %s17, 1
        %s151 = scalar_select %p150, %s17, 1
        %s152 = smul.addr %s151, 8
        %s153 = scalar_lea.vmem %s0, %s152
        %v154 = vld [vmem:[%s153] sm:$0xff]
        %v155 = vlaneseq
        %v156 = vand.u32 %v155, 127
        %157 = vset.pattern.permute.xlu0 0
        %158 = vperm.xlu0 %157, %v154
        %v159 = vpop.permute.xlu0 %158
        %vm160 = vcmp.eq.s32.totalorder %v159, %v156
        %v161 = vsel %vm160, 1, 0
        %v162 = vcvt.s32.f32 %v161
        %v163 = vld [vmem:[#allocation3] sm:$0xff]
        %v164 = vld [vmem:[#allocation3 + $0x8] sm:$0xff]
        %v165 = vld [vmem:[#allocation3 + $0x10] sm:$0xff]
        %v166 = vld [vmem:[#allocation3 + $0x18] sm:$0xff]
        %v167 = vld [vmem:[#allocation3 + $0x20] sm:$0xff]
        %v168 = vld [vmem:[#allocation3 + $0x28] sm:$0xff]
        %v169 = vld [vmem:[#allocation3 + $0x30] sm:$0xff]
        %v170 = vld [vmem:[#allocation3 + $0x38] sm:$0xff]
        %vm171 = vcmask 523264
        %v173 = vsel %vm171, %v162, 0
        %175 = vmatprep.subr.mxu0 0.0
        %176 = vmatpush1.msra.mxu0 %v163
        %177 = vmatprep.subr.mxu0 0.0
        %178 = vmatpush1.msra.mxu0 %v164
        %179 = vmatprep.subr.mxu0 0.0
        %180 = vmatpush1.msra.mxu0 %v165
        %181 = vmatprep.subr.mxu0 0.0
        %182 = vmatpush1.msra.mxu0 %v166
        %183 = vmatprep.subr.mxu0 0.0
        %184 = vmatpush1.msra.mxu0 %v167
        %185 = vmatprep.subr.mxu0 0.0
        %186 = vmatpush1.msra.mxu0 %v168
        %187 = vmatprep.subr.mxu0 0.0
        %188 = vmatpush1.msra.mxu0 %v169
        %189 = vmatprep.subr.mxu0 0.0
        %190 = vmatpush1.msra.mxu0 %v170
        %191 = vmatprep.subr.mxu0 0.0
        %192 = vmatpush1.msra.mxu0 0.0
        %193 = vmatprep.subr.mxu0 0.0
        %194 = vmatpush1.msra.mxu0 0.0
        %195 = vmatprep.subr.mxu0 0.0
        %196 = vmatpush1.msra.mxu0 0.0
        %197 = vmatprep.subr.mxu0 0.0
        %198 = vmatpush1.msra.mxu0 0.0
        %199 = vmatprep.subr.mxu0 0.0
        %200 = vmatpush1.msra.mxu0 0.0
        %201 = vmatprep.subr.mxu0 0.0
        %202 = vmatpush1.msra.mxu0 0.0
        %203 = vmatprep.subr.mxu0 0.0
        %204 = vmatpush1.msra.mxu0 0.0
        %205 = vmatprep.subr.mxu0 0.0
        %206 = vmatpush1.msra.mxu0 0.0
        %207 = vmatprep.subr.mxu0 0.0
        %208 = vmatpush1.msra.mxu0 0.0
        %209 = vmatprep.subr.mxu0 0.0
        %210 = vmatpush1.msra.mxu0 0.0
        %211 = vmatprep.subr.mxu0 0.0
        %212 = vmatpush1.msra.mxu0 0.0
        %213 = vmatprep.subr.mxu0 0.0
        %214 = vmatpush1.msra.mxu0 0.0
        %215 = vmatprep.subr.mxu0 0.0
        %216 = vmatpush1.msra.mxu0 0.0
        %217 = vmatprep.subr.mxu0 0.0
        %218 = vmatpush1.msra.mxu0 0.0
        %219 = vmatprep.subr.mxu0 0.0
        %220 = vmatpush1.msra.mxu0 0.0
        %221 = vmatprep.subr.mxu0 0.0
        %222 = vmatpush1.msra.mxu0 0.0
        %223 = vmatprep.subr.mxu0 0.0
        %224 = vmatpush1.msra.mxu0 0.0
        %225 = vmatprep.subr.mxu0 0.0
        %226 = vmatpush1.msra.mxu0 0.0
        %227 = vmatprep.subr.mxu0 0.0
        %228 = vmatpush1.msra.mxu0 0.0
        %229 = vmatprep.subr.mxu0 0.0
        %230 = vmatpush1.msra.mxu0 0.0
        %231 = vmatprep.subr.mxu0 0.0
        %232 = vmatpush1.msra.mxu0 0.0
        %233 = vmatprep.subr.mxu0 0.0
        %234 = vmatpush1.msra.mxu0 0.0
        %235 = vmatprep.subr.mxu0 0.0
        %236 = vmatpush1.msra.mxu0 0.0
        %237 = vmatprep.subr.mxu0 0.0
        %238 = vmatpush1.msra.mxu0 0.0
        %239 = vmatprep.mubr.f32.mxu0 0.0
        %240 = vmatmul.mubr.f32.gmra.mrb[0].mxu0 %v173
        %v241 = vpop.f32.mrb[0].mxu0
        %v242 = vadd.f32 0.0, %v241
        %v243 = vpop.f32.mrb[0].mxu0
        %244 = vdwg.mxu0
        %245 = vst [vmem:[#allocation2] sm:$0xff] %v242
        %v246 = vld [vmem:[#allocation2] sm:$0xff]
        %v247 = vmul.f32 %v246, 11.313708
        %248 = vst [vmem:[%s149] sm:$0xff] %v247
        %s249 = sand.u32 %s72, 1
        %s250 = scalar_lea.sflag [#allocation5], %s249
        %s251 = sand.u32 %s72, 1
        %s252 = smul.addr %s251, 8
        %s253 = scalar_lea.vmem [#allocation6], %s252
        // Predicated region
        $region33: #{tpu_custom_call.1} parent=27 // pred_check
          %p254 = pneg %p82
        $region34: #{tpu_custom_call.1} parent=27 // pred_check_branch
          %256 = sbr.rel (%p254) target = $region36
        $region35: #{tpu_custom_call.1} parent=27 // pred_region
          %s258 = ssub.s32 128, 128
          %259 = vsyncadd %s250, %s258
          %s260 = smul.addr %s17, 128
          %s261 = scalar_lea.hbm %s2, %s260
          %s263 = sshll.u32 %s253, 4
          %s264 = int_to_ptr.vmem [resolvable:$true] %s263
          %266 = dma.vmem_to_hbm [thread:$0]  %s264, 128, %s261, %s250
        $region36: #{tpu_custom_call.1} parent=27 // pred_fallthru
          _
      $region28: #{tpu_custom_call.1} parent=5 // pred_fallthru
        _
      %p267 = scmp.le.s32.totalorder 2, %s12
      // Predicated region
      $region37: #{tpu_custom_call.1} parent=5 // pred_check
        %p268 = pneg %p267
      $region38: #{tpu_custom_call.1} parent=5 // pred_check_branch
        %270 = sbr.rel (%p268) target = $region40
      $region39: #{tpu_custom_call.1} parent=5 // pred_region
        %s271 = ssub.s32 %s12, 2
        // Predicated region
        $region41: #{tpu_custom_call.1} parent=39 // pred_check
          %p272 = pneg %p88
        $region42: #{tpu_custom_call.1} parent=39 // pred_check_branch
          %274 = sbr.rel (%p272) target = $region44
        $region43: #{tpu_custom_call.1} parent=39 // pred_region
          %s275 = sand.u32 %s73, 1
          %s276 = scalar_lea.sflag [#allocation5], %s275
          %s277 = sand.u32 %s73, 1
          %s278 = smul.addr %s277, 8
          %s279 = scalar_lea.vmem [#allocation6], %s278
          %280 = dma.done %s276, 128
        $region44: #{tpu_custom_call.1} parent=39 // pred_fallthru
          _
      $region40: #{tpu_custom_call.1} parent=5 // pred_fallthru
        _
    $region6: #{tpu_custom_call.1} parent=1 // loop_footer
      %s16 = sadd.s32 1, %s12
    $region7: #{tpu_custom_call.1} parent=1 // loop_footer_branch
      %11 = sbr.rel target = $region3
    $region8: #{tpu_custom_call.1} parent=1 // loop_exit
      _
    %281 = vsyncpa [#allocation4], 1
    %s282 = scalar_lea.sflag [#allocation4], 1
    %283 = vsyncpa %s282, 1
    %284 = vsyncpa [#allocation5], 1
    %s285 = scalar_lea.sflag [#allocation5], 1
    %286 = vsyncpa %s285, 1

</llo_original>
